<compile_context>
chip_gen: v5e
topology: v5e:2x2
jax: 0.10.0
libtpu: 0.0.40
codegen_flags: <defaults>
</compile_context>

<pallas_src>
import numpy as np
import jax
import jax.numpy as jnp
from jax.experimental import pallas as pl
from jax.experimental.pallas import tpu as pltpu


# ----------------------------------------------------------------------------
# Hardware queries (defensive: fall back to conservative defaults).
# ----------------------------------------------------------------------------
def _tpu_vmem_capacity_bytes() -> int:
    try:
        return int(pltpu.get_tpu_info().vmem_capacity_bytes)
    except Exception:
        return 64 * 1024 * 1024            # conservative (v7x per-core VMEM)


def _tpu_num_cores() -> int:
    # v7x has 2 TensorCores per chip; v5e/v6e have 1.
    try:
        kind = jax.devices()[0].device_kind.lower()
    except Exception:
        kind = ""
    return 2 if ("v7" in kind or "7x" in kind) else 1


def _vmem_budget_and_limit():
    cap = _tpu_vmem_capacity_bytes()
    budget = int(cap * 0.60)               # for the double-buffered x-in / y-out tiles
    limit = int(cap * 0.90)                # scoped VMEM limit handed to Mosaic
    return budget, limit


def _dim_semantics(num_cores: int):
    if num_cores > 1:
        # Only core_parallel actually changes codegen; shards the D grid across
        # the two v7x TensorCores (each with its own HBM path).
        return (pltpu.CORE_PARALLEL,)
    return ("parallel",)


# ----------------------------------------------------------------------------
# Tile-size selection for the feature (lane) axis.
# Per grid step the dominant VMEM consumers are the double-buffered (B, TILE_D)
# input and output tiles: 4 * B * TILE_D * itemsize bytes.
# ----------------------------------------------------------------------------
def _choose_tile_d(batch: int, d: int, itemsize: int,
                   budget_bytes: int, num_cores: int = 1) -> int:
    per_lane_bytes = 4 * batch * itemsize
    max_tile = budget_bytes // per_lane_bytes

    if max_tile < 128 and max_tile < d:
        # TODO(synk): add a batch-blocked ("arbitrary" B-grid, P3 accumulator)
        # stats pass + second normalize pass for batches too large for VMEM.
        raise ValueError(
            f"batch={batch} (itemsize={itemsize}) too large for a single "
            f"(B, 128) VMEM tile under a {budget_bytes // (1 << 20)} MiB budget; "
            "batch-blocked fallback not implemented")

    max_tile = max(128, (max_tile // 128) * 128)   # lane-dense multiple of 128
    td = d if d <= max_tile else max_tile

    # On multi-core chips keep >=num_cores grid steps when D allows it, so the
    # feature grid can actually be sharded across TensorCores.
    if num_cores > 1 and td == d and d >= num_cores * 128:
        per_core = -(-d // num_cores)               # ceil
        td = ((per_core + 127) // 128) * 128
    return int(td)


# ----------------------------------------------------------------------------
# Kernels
# ----------------------------------------------------------------------------
def _bn_train_kernel(momentum: float, batch: int):
    inv_b = 1.0 / batch
    inv_bm1 = 1.0 / (batch - 1)

    def kernel(x_ref, mean_ref, std_ref, out_ref, new_mean_ref, new_std_ref):
        x = x_ref[...].astype(jnp.float32)                     # (B, TILE_D)

        # ---- two-pass batch statistics (numerically stable; extra VALU pass
        #      is free filler under the HBM DMA for this memory-bound op) ----
        batch_mean = jnp.sum(x, axis=0, keepdims=True) * inv_b  # (1, TILE_D)
        diff = x - batch_mean
        var = jnp.sum(diff * diff, axis=0, keepdims=True) * inv_bm1
        batch_std = jnp.sqrt(var)

        # ---- running-buffer EMA update (float32) ----
        new_mean = (1.0 - momentum) * mean_ref[...].astype(jnp.float32) \
            + momentum * batch_mean
        new_std = (1.0 - momentum) * std_ref[...].astype(jnp.float32) \
            + momentum * batch_std
        new_mean_ref[...] = new_mean.astype(new_mean_ref.dtype)
        new_std_ref[...] = new_std.astype(new_std_ref.dtype)

        # ---- normalize with the *updated* buffers ----
        inv_std = pl.reciprocal(new_std, approx=False)           # (1, TILE_D) row
        out_ref[...] = ((x - new_mean) * inv_std).astype(out_ref.dtype)

    return kernel


def _bn_eval_kernel(x_ref, mean_ref, std_ref, out_ref):
    inv_std = pl.reciprocal(std_ref[...].astype(jnp.float32), approx=False)
    out_ref[...] = ((x_ref[...].astype(jnp.float32)
                     - mean_ref[...].astype(jnp.float32)) * inv_std
                    ).astype(out_ref.dtype)


def _bn_inverse_kernel(y_ref, mean_ref, std_ref, out_ref):
    out_ref[...] = (mean_ref[...].astype(jnp.float32)
                    + y_ref[...].astype(jnp.float32)
                    * std_ref[...].astype(jnp.float32)).astype(out_ref.dtype)


# ----------------------------------------------------------------------------
# Wrappers
# ----------------------------------------------------------------------------
def batch_norm_with_inverse_forward(x, mean, std, momentum=0.01, training=True,
                                    tile_d=None):
    """Pallas implementation of BatchNormWithInverse.forward.

    Returns (y, new_mean, new_std). In eval mode the buffers pass through
    unchanged and y = (x - mean) / std.
    """
    B, D = x.shape
    assert mean.shape == (1, D) and std.shape == (1, D)

    itemsize = int(jnp.dtype(x.dtype).itemsize)
    budget, vmem_limit = _vmem_budget_and_limit()
    num_cores = _tpu_num_cores()
    td = int(tile_d) if tile_d is not None else _choose_tile_d(
        B, D, itemsize, budget, num_cores)

    grid = (pl.cdiv(D, td),)
    cparams = pltpu.CompilerParams(
        dimension_semantics=_dim_semantics(num_cores),
        vmem_limit_bytes=vmem_limit)

    x_spec = pl.BlockSpec((B, td), lambda j: (0, j))
    row_spec = pl.BlockSpec((1, td), lambda j: (0, j))
    buf_itemsize = int(jnp.dtype(mean.dtype).itemsize)

    if not training:
        cost = pl.CostEstimate(
            flops=3 * B * D,
            transcendentals=D,
            bytes_accessed=2 * B * D * itemsize + 2 * D * buf_itemsize)
        y = pl.pallas_call(
            _bn_eval_kernel,
            out_shape=jax.ShapeDtypeStruct((B, D), x.dtype),
            grid=grid,
            in_specs=[x_spec, row_spec, row_spec],
            out_specs=x_spec,
            compiler_params=cparams,
            cost_estimate=cost,
        )(x, mean, std)
        return y, mean, std

    assert B >= 2, "unbiased std needs at least 2 batch elements"

    cost = pl.CostEstimate(
        flops=8 * B * D,
        transcendentals=2 * D,                   # sqrt + reciprocal per feature
        bytes_accessed=2 * B * D * itemsize + 4 * D * buf_itemsize)

    kernel = _bn_train_kernel(float(momentum), int(B))
    y, new_mean, new_std = pl.pallas_call(
        kernel,
        out_shape=(
            jax.ShapeDtypeStruct((B, D), x.dtype),
            jax.ShapeDtypeStruct((1, D), mean.dtype),
            jax.ShapeDtypeStruct((1, D), std.dtype),
        ),
        grid=grid,
        in_specs=[x_spec, row_spec, row_spec],
        out_specs=(x_spec, row_spec, row_spec),
        compiler_params=cparams,
        cost_estimate=cost,
    )(x, mean, std)
    return y, new_mean, new_std


def batch_norm_with_inverse_inverse(y, mean, std, tile_d=None):
    """Pallas implementation of BatchNormWithInverse.inverse: mean + y * std."""
    B, D = y.shape
    itemsize = int(jnp.dtype(y.dtype).itemsize)
    budget, vmem_limit = _vmem_budget_and_limit()
    num_cores = _tpu_num_cores()
    td = int(tile_d) if tile_d is not None else _choose_tile_d(
        B, D, itemsize, budget, num_cores)
    grid = (pl.cdiv(D, td),)

    buf_itemsize = int(jnp.dtype(mean.dtype).itemsize)
    cost = pl.CostEstimate(
        flops=2 * B * D,
        transcendentals=0,
        bytes_accessed=2 * B * D * itemsize + 2 * D * buf_itemsize)

    return pl.pallas_call(
        _bn_inverse_kernel,
        out_shape=jax.ShapeDtypeStruct((B, D), y.dtype),
        grid=grid,
        in_specs=[pl.BlockSpec((B, td), lambda j: (0, j)),
                  pl.BlockSpec((1, td), lambda j: (0, j)),
                  pl.BlockSpec((1, td), lambda j: (0, j))],
        out_specs=pl.BlockSpec((B, td), lambda j: (0, j)),
        compiler_params=pltpu.CompilerParams(
            dimension_semantics=_dim_semantics(num_cores),
            vmem_limit_bytes=vmem_limit),
        cost_estimate=cost,
    )(y, mean, std)


# ----------------------------------------------------------------------------
# Pure-JAX reference matching the PyTorch training-mode forward.
# ----------------------------------------------------------------------------
def _reference_forward(x, mean, std, momentum):
    B = x.shape[0]
    batch_mean = jnp.mean(x, axis=0, keepdims=True)
    batch_std = jnp.sqrt(
        jnp.sum((x - batch_mean) ** 2, axis=0, keepdims=True) / (B - 1))
    new_mean = (1.0 - momentum) * mean + momentum * batch_mean
    new_std = (1.0 - momentum) * std + momentum * batch_std
    return (x - new_mean) / new_std, new_mean, new_std


if __name__ == "__main__":
    key = jax.random.PRNGKey(0)
    momentum = 0.01

    # --- case 1: module's demo shape (D < 128 -> single full-D tile) ---------
    batch, normalized_shape = 8, 32
    x = jax.random.normal(key, (batch, normalized_shape), dtype=jnp.float32)
    # offset the data so a cancellation-prone variance formula would be exposed
    x = x + 3.0
    mean = jnp.zeros((1, normalized_shape), dtype=jnp.float32)   # buffer init
    std = jnp.ones((1, normalized_shape), dtype=jnp.float32)

    y, new_mean, new_std = batch_norm_with_inverse_forward(
        x, mean, std, momentum=momentum, training=True)
    jax.block_until_ready((y, new_mean, new_std))

    y_ref, mean_ref, std_ref = _reference_forward(x, mean, std, momentum)
    assert np.allclose(np.asarray(y), np.asarray(y_ref), rtol=1e-5, atol=1e-5)
    assert np.allclose(np.asarray(new_mean), np.asarray(mean_ref), rtol=1e-5, atol=1e-6)
    assert np.allclose(np.asarray(new_std), np.asarray(std_ref), rtol=1e-5, atol=1e-6)

    # round-trip through inverse() with the updated buffers
    x_rec = batch_norm_with_inverse_inverse(y, new_mean, new_std)
    jax.block_until_ready(x_rec)
    assert np.allclose(np.asarray(x_rec), np.asarray(x), rtol=1e-5, atol=1e-5)

    # eval-mode forward (buffers unchanged)
    y_eval, m_e, s_e = batch_norm_with_inverse_forward(
        x, new_mean, new_std, momentum=momentum, training=False)
    jax.block_until_ready(y_eval)
    assert np.allclose(np.asarray(y_eval),
                       np.asarray((x - new_mean) / new_std), rtol=1e-5, atol=1e-5)

    # --- case 2: wider D with a forced 128-lane tile (exercises the grid) ----
    batch2, d2 = 16, 384
    x2 = jax.random.normal(jax.random.PRNGKey(1), (batch2, d2), dtype=jnp.float32)
    mean2 = jnp.zeros((1, d2), dtype=jnp.float32)
    std2 = jnp.ones((1, d2), dtype=jnp.float32)

    y2, nm2, ns2 = batch_norm_with_inverse_forward(
        x2, mean2, std2, momentum=momentum, training=True, tile_d=128)
    jax.block_until_ready((y2, nm2, ns2))

    y2_ref, m2_ref, s2_ref = _reference_forward(x2, mean2, std2, momentum)
    assert np.allclose(np.asarray(y2), np.asarray(y2_ref), rtol=1e-5, atol=1e-5)
    assert np.allclose(np.asarray(nm2), np.asarray(m2_ref), rtol=1e-5, atol=1e-6)
    assert np.allclose(np.asarray(ns2), np.asarray(s2_ref), rtol=1e-5, atol=1e-6)

    x2_rec = batch_norm_with_inverse_inverse(y2, nm2, ns2, tile_d=128)
    jax.block_until_ready(x2_rec)
    assert np.allclose(np.asarray(x2_rec), np.asarray(x2), rtol=1e-5, atol=1e-5)

    # --- case 3: auto tile choice on a wider array (exercises budget logic) --
    y3, nm3, ns3 = batch_norm_with_inverse_forward(
        x2, mean2, std2, momentum=momentum, training=True)
    jax.block_until_ready((y3, nm3, ns3))
    assert np.allclose(np.asarray(y3), np.asarray(y2_ref), rtol=1e-5, atol=1e-5)

    print("KERNEL_OK")
</pallas_src>

<mosaic_0001>
module attributes {stable_mosaic.version = 11 : i64} {
  func.func @kernel(%arg0: i32, %arg1: memref<8x32xf32, #tpu.memory_space<vmem>>, %arg2: memref<1x32xf32, #tpu.memory_space<vmem>>, %arg3: memref<1x32xf32, #tpu.memory_space<vmem>>, %arg4: memref<8x32xf32, #tpu.memory_space<vmem>>, %arg5: memref<1x32xf32, #tpu.memory_space<vmem>>, %arg6: memref<1x32xf32, #tpu.memory_space<vmem>>) attributes {dimension_semantics = [#tpu.dimension_semantics<parallel>], iteration_bounds = array<i64: 1>, scalar_prefetch = 0 : i64, scratch_operands = 0 : i64, tpu.core_type = #tpu.core_type<tc>, window_params = [{transform_indices = @transform_0, window_bounds = array<i64: 8, 32>}, {transform_indices = @transform_1, window_bounds = array<i64: 1, 32>}, {transform_indices = @transform_2, window_bounds = array<i64: 1, 32>}, {transform_indices = @transform_3, window_bounds = array<i64: 8, 32>}, {transform_indices = @transform_4, window_bounds = array<i64: 1, 32>}, {transform_indices = @transform_5, window_bounds = array<i64: 1, 32>}]} {
    %c0 = arith.constant 0 : index
    %c0_0 = arith.constant 0 : index
    %0 = vector.load %arg1[%c0, %c0_0] : memref<8x32xf32, #tpu.memory_space<vmem>>, vector<8x32xf32>
    %cst = arith.constant dense<0.000000e+00> : vector<32xf32>
    %1 = vector.multi_reduction <add>, %0, %cst [0] : vector<8x32xf32> to vector<32xf32>
    %2 = vector.shape_cast %1 : vector<32xf32> to vector<1x32xf32>
    %cst_1 = arith.constant 1.250000e-01 : f32
    %3 = vector.broadcast %cst_1 : f32 to vector<1x32xf32>
    %4 = arith.mulf %2, %3 : vector<1x32xf32>
    %5 = vector.broadcast %4 : vector<1x32xf32> to vector<8x32xf32>
    %6 = arith.subf %0, %5 : vector<8x32xf32>
    %7 = arith.mulf %6, %6 : vector<8x32xf32>
    %cst_2 = arith.constant dense<0.000000e+00> : vector<32xf32>
    %8 = vector.multi_reduction <add>, %7, %cst_2 [0] : vector<8x32xf32> to vector<32xf32>
    %9 = vector.shape_cast %8 : vector<32xf32> to vector<1x32xf32>
    %cst_3 = arith.constant 0.142857149 : f32
    %10 = vector.broadcast %cst_3 : f32 to vector<1x32xf32>
    %11 = arith.mulf %9, %10 : vector<1x32xf32>
    %12 = math.sqrt %11 : vector<1x32xf32>
    %c0_4 = arith.constant 0 : index
    %c0_5 = arith.constant 0 : index
    %13 = vector.load %arg2[%c0_4, %c0_5] : memref<1x32xf32, #tpu.memory_space<vmem>>, vector<1x32xf32>
    %cst_6 = arith.constant 9.900000e-01 : f32
    %14 = vector.broadcast %cst_6 : f32 to vector<1x32xf32>
    %15 = arith.mulf %14, %13 : vector<1x32xf32>
    %cst_7 = arith.constant 0.00999999977 : f32
    %16 = vector.broadcast %cst_7 : f32 to vector<1x32xf32>
    %17 = arith.mulf %16, %4 : vector<1x32xf32>
    %18 = arith.addf %15, %17 : vector<1x32xf32>
    %c0_8 = arith.constant 0 : index
    %c0_9 = arith.constant 0 : index
    %19 = vector.load %arg3[%c0_8, %c0_9] : memref<1x32xf32, #tpu.memory_space<vmem>>, vector<1x32xf32>
    %cst_10 = arith.constant 9.900000e-01 : f32
    %20 = vector.broadcast %cst_10 : f32 to vector<1x32xf32>
    %21 = arith.mulf %20, %19 : vector<1x32xf32>
    %cst_11 = arith.constant 0.00999999977 : f32
    %22 = vector.broadcast %cst_11 : f32 to vector<1x32xf32>
    %23 = arith.mulf %22, %12 : vector<1x32xf32>
    %24 = arith.addf %21, %23 : vector<1x32xf32>
    %c0_12 = arith.constant 0 : index
    %c0_13 = arith.constant 0 : index
    %25 = vector.load %arg5[%c0_12, %c0_13] : memref<1x32xf32, #tpu.memory_space<vmem>>, vector<1x32xf32>
    tpu.vector_store %arg5[%c0_12, %c0_13], %18 {strides = array<i32>} : memref<1x32xf32, #tpu.memory_space<vmem>>, vector<1x32xf32>,
    %c0_14 = arith.constant 0 : index
    %c0_15 = arith.constant 0 : index
    %26 = vector.load %arg6[%c0_14, %c0_15] : memref<1x32xf32, #tpu.memory_space<vmem>>, vector<1x32xf32>
    tpu.vector_store %arg6[%c0_14, %c0_15], %24 {strides = array<i32>} : memref<1x32xf32, #tpu.memory_space<vmem>>, vector<1x32xf32>,
    %27 = tpu.reciprocal %24 : vector<1x32xf32> -> vector<1x32xf32>
    %28 = vector.broadcast %18 : vector<1x32xf32> to vector<8x32xf32>
    %29 = arith.subf %0, %28 : vector<8x32xf32>
    %30 = vector.broadcast %27 : vector<1x32xf32> to vector<8x32xf32>
    %31 = arith.mulf %29, %30 : vector<8x32xf32>
    %c0_16 = arith.constant 0 : index
    %c0_17 = arith.constant 0 : index
    %32 = vector.load %arg4[%c0_16, %c0_17] : memref<8x32xf32, #tpu.memory_space<vmem>>, vector<8x32xf32>
    tpu.vector_store %arg4[%c0_16, %c0_17], %31 {strides = array<i32>} : memref<8x32xf32, #tpu.memory_space<vmem>>, vector<8x32xf32>,
    return
  }
  func.func @transform_0(%arg0: i32) -> (i32, i32) {
    %c0_i32 = arith.constant 0 : i32
    %c0_i32_0 = arith.constant 0 : i32
    return %c0_i32, %arg0 : i32, i32
  }
  func.func @transform_1(%arg0: i32) -> (i32, i32) {
    %c0_i32 = arith.constant 0 : i32
    %c0_i32_0 = arith.constant 0 : i32
    return %c0_i32, %arg0 : i32, i32
  }
  func.func @transform_2(%arg0: i32) -> (i32, i32) {
    %c0_i32 = arith.constant 0 : i32
    %c0_i32_0 = arith.constant 0 : i32
    return %c0_i32, %arg0 : i32, i32
  }
  func.func @transform_3(%arg0: i32) -> (i32, i32) {
    %c0_i32 = arith.constant 0 : i32
    %c0_i32_0 = arith.constant 0 : i32
    return %c0_i32, %arg0 : i32, i32
  }
  func.func @transform_4(%arg0: i32) -> (i32, i32) {
    %c0_i32 = arith.constant 0 : i32
    %c0_i32_0 = arith.constant 0 : i32
    return %c0_i32, %arg0 : i32, i32
  }
  func.func @transform_5(%arg0: i32) -> (i32, i32) {
    %c0_i32 = arith.constant 0 : i32
    %c0_i32_0 = arith.constant 0 : i32
    return %c0_i32, %arg0 : i32, i32
  }
}

</mosaic_0001>

<llo_original>
// kernel: tpu_custom_call.1
$region0: #{tpu_custom_call.1}
  #allocation0 [shape = 'u32[]', space=smem, size = 0x4, offset = 0x4, fixed_abs, tag = 'smem constant byte address 0x4 - core index']
  #allocation1 [shape = 'u32[72,128]{1,0:T(1,128)}', space=vmem, size = 0x9000, scoped, tag = 'internal scratch']
  %s0 = inlined_call_operand.hbm [shape: f32[8,32], index: 0, kind: input, shape index: {}]
  %s1 = inlined_call_operand.hbm [shape: f32[1,32], index: 1, kind: input, shape index: {}]
  %s2 = inlined_call_operand.vmem [shape: f32[1,32], index: 2, kind: input, shape index: {}]
  %s3 = inlined_call_operand.hbm [shape: f32[8,32], index: 3, kind: output, shape index: {0}]
  %s4 = inlined_call_operand.hbm [shape: f32[1,32], index: 4, kind: output, shape index: {1}]
  %s5 = inlined_call_operand.hbm [shape: f32[1,32], index: 5, kind: output, shape index: {2}]
  %6 = xla_tuple %s3, %s4, %s5
  %s7 = sld [smem:[#allocation0]]
  $region46: #{tpu_custom_call.1} parent=0
    _
  %s9 = ssub.s32 1, %s7
  %s10 = scalar_select 0, %s9, %s7
  $region1: #{tpu_custom_call.1} parent=0
    #allocation2 [shape = 'u8[4096]{0}', space=vmem, size = 0x1000, scoped, tag = 'input window, operand 0, single buffered']
    #allocation3 [shape = 's32[1]{0}', space=sflag, size = 0x4, scoped, tag = 'scoped memory for tpu_custom_call.1']
    #allocation4 [shape = 's32[1]{0}', space=sflag, size = 0x4, scoped, tag = 'scoped memory for tpu_custom_call.1']
    #allocation5 [shape = 'u8[512]{0}', space=vmem, size = 0x400, scoped, tag = 'input window, operand 1, single buffered']
    #allocation6 [shape = 's32[1]{0}', space=sflag, size = 0x4, scoped, tag = 'scoped memory for tpu_custom_call.1']
    #allocation7 [shape = 'u8[4096]{0}', space=vmem, size = 0x1000, scoped, tag = 'output window, operand 0, single buffered']
    #allocation8 [shape = 'u8[512]{0}', space=vmem, size = 0x400, scoped, tag = 'output window, operand 1, single buffered']
    #allocation9 [shape = 's32[1]{0}', space=sflag, size = 0x4, scoped, tag = 'scoped memory for tpu_custom_call.1']
    #allocation10 [shape = 'u8[512]{0}', space=vmem, size = 0x400, scoped, tag = 'output window, operand 2, single buffered']
    %11 = vsyncpa [#allocation3], 0
    %12 = vsyncpa [#allocation6], 0
    %13 = vsyncpa [#allocation4], 0
    %14 = vsyncpa [#allocation9], 0
    // Predicated region
    $region2: #{tpu_custom_call.1} parent=1 // pred_check
      _
    $region3: #{tpu_custom_call.1} parent=1 // pred_check_branch
      %16 = sbr.rel (0) target = $region5
    $region4: #{tpu_custom_call.1} parent=1 // pred_region
      %18 = vsyncadd [#allocation3], 0
      %s20 = sshll.u32 %s0, 4
      %s21 = int_to_ptr.hbm [resolvable:$true] %s20
      %s22 = sshll.u32 [#allocation2], 4
      %s23 = int_to_ptr.vmem [resolvable:$true] %s22
      %25 = dma.hbm_to_vmem [thread:$0]  %s21, 128, %s23, [#allocation3]
    $region5: #{tpu_custom_call.1} parent=1 // pred_fallthru
      _
    // Predicated region
    $region6: #{tpu_custom_call.1} parent=1 // pred_check
      _
    $region7: #{tpu_custom_call.1} parent=1 // pred_check_branch
      %27 = sbr.rel (0) target = $region9
    $region8: #{tpu_custom_call.1} parent=1 // pred_region
      %29 = vsyncadd [#allocation6], 0
      %s31 = sshll.u32 %s1, 4
      %s32 = int_to_ptr.hbm [resolvable:$true] %s31
      %s33 = sshll.u32 [#allocation5], 4
      %s34 = int_to_ptr.vmem [resolvable:$true] %s33
      %36 = dma.hbm_to_vmem [thread:$0]  %s32, 16, %s34, [#allocation6]
    $region9: #{tpu_custom_call.1} parent=1 // pred_fallthru
      _
    // Predicated region
    $region10: #{tpu_custom_call.1} parent=1 // pred_check
      _
    $region11: #{tpu_custom_call.1} parent=1 // pred_check_branch
      %38 = sbr.rel (0) target = $region13
    $region12: #{tpu_custom_call.1} parent=1 // pred_region
      _
    $region13: #{tpu_custom_call.1} parent=1 // pred_fallthru
      _
    // Predicated region
    $region14: #{tpu_custom_call.1} parent=1 // pred_check
      _
    $region15: #{tpu_custom_call.1} parent=1 // pred_check_branch
      %40 = sbr.rel (0) target = $region17
    $region16: #{tpu_custom_call.1} parent=1 // pred_region
      %42 = dma.done [#allocation3], 128
    $region17: #{tpu_custom_call.1} parent=1 // pred_fallthru
      _
    // Predicated region
    $region18: #{tpu_custom_call.1} parent=1 // pred_check
      _
    $region19: #{tpu_custom_call.1} parent=1 // pred_check_branch
      %44 = sbr.rel (0) target = $region21
    $region20: #{tpu_custom_call.1} parent=1 // pred_region
      %46 = dma.done [#allocation6], 16
    $region21: #{tpu_custom_call.1} parent=1 // pred_fallthru
      _
    %v47 = vld [vmem:[#allocation2] sm:$0xff]
    %vm48 = vcmask 261120
    %v49 = vsel %vm48, %v47, 0.0
    %v50 = vrot.slane %v49, 4
    %v51 = vadd.f32 %v49, %v50
    %v52 = vrot.slane %v51, 2
    %v53 = vadd.f32 %v51, %v52
    %v54 = vrot.slane %v53, 1
    %v55 = vadd.f32 %v53, %v54
    %v56 = vmul.f32 %v55, 0.125
    %v57 = vsub.f32 %v47, %v56
    %v58 = vmul.f32 %v57, %v57
    %v59 = vsel %vm48, %v58, 0.0
    %v60 = vrot.slane %v59, 4
    %v61 = vadd.f32 %v59, %v60
    %v62 = vrot.slane %v61, 2
    %v63 = vadd.f32 %v61, %v62
    %v64 = vrot.slane %v63, 1
    %v65 = vadd.f32 %v63, %v64
    %v66 = vmul.f32 %v65, 0.14285715
    %v67 = vrsqrt.pop %v66
    %v68 = vmul.f32 %v67, %v66
    %v69 = vmul.f32 %v68, %v67
    %v70 = vmul.f32 0.5, %v69
    %v71 = vsub.f32 1.5, %v70
    %v72 = vmul.f32 %v67, %v71
    %v73 = vmul.f32 %v66, %v72
    %vm74 = vcmp.eq.f32.partialorder %v66, inf
    %v75 = vsel %vm74, %v66, %v73
    %vm76 = vcmp.eq.f32.partialorder %v66, 0.0
    %v77 = vand.u32 %v66, 2147483648
    %v78 = vsel %vm76, %v77, %v75
    %v79 = vld [vmem:[#allocation5] sm:$0x1]
    %v80 = vmul.f32 %v79, 0.99
    %v81 = vmul.f32 %v56, 0.01
    %v82 = vadd.f32 %v80, %v81
    %v83 = vld [vmem:[%s2] sm:$0x1]
    %v84 = vmul.f32 %v83, 0.99
    %v85 = vmul.f32 %v78, 0.01
    %v86 = vadd.f32 %v84, %v85
    %vm87 = vcmask 253952
    %88 = vst.msk [vmem:[#allocation8] sm:$0x1] %vm87, %v82
    %89 = vst.msk [vmem:[#allocation10] sm:$0x1] %vm87, %v86
    %v90 = vrcp.pop %v86
    %v91 = vmul.f32 %v86, %v90
    %v92 = vsub.f32 1.0, %v91
    %v93 = vmul.f32 %v90, %v92
    %v94 = vadd.f32 %v90, %v93
    %vm95 = vweird.f32 %v86
    %vm96 = vweird.f32 %v90
    %vm97 = vmor %vm95, %vm96
    %v98 = vsel %vm97, %v90, %v94
    %v99 = vand.u32 2147483647, %v86
    %vm100 = vcmp.eq.f32.partialorder %v99, 8.507059e+37
    %v101 = vand.u32 %v86, 2147483648
    %v102 = vor.u32 1.1754944e-38, %v101
    %v103 = vsel %vm100, %v102, %v98
    %v105 = vperm.slane %v82, 0
    %v107 = vsub.f32 %v47, %v105
    %v109 = vperm.slane %v103, 0
    %v111 = vmul.f32 %v107, %v109
    %112 = vst.msk [vmem:[#allocation7] sm:$0xff] %vm48, %v111
    // Predicated region
    $region22: #{tpu_custom_call.1} parent=1 // pred_check
      _
    $region23: #{tpu_custom_call.1} parent=1 // pred_check_branch
      %114 = sbr.rel (0) target = $region25
    $region24: #{tpu_custom_call.1} parent=1 // pred_region
      %116 = vsyncadd [#allocation4], 0
      %s118 = sshll.u32 [#allocation7], 4
      %s119 = int_to_ptr.vmem [resolvable:$true] %s118
      %s120 = sshll.u32 %s3, 4
      %s121 = int_to_ptr.hbm [resolvable:$true] %s120
      %123 = dma.vmem_to_hbm [thread:$0]  %s119, 128, %s121, [#allocation4]
    $region25: #{tpu_custom_call.1} parent=1 // pred_fallthru
      _
    // Predicated region
    $region26: #{tpu_custom_call.1} parent=1 // pred_check
      _
    $region27: #{tpu_custom_call.1} parent=1 // pred_check_branch
      %125 = sbr.rel (0) target = $region29
    $region28: #{tpu_custom_call.1} parent=1 // pred_region
      %127 = vsyncadd [#allocation9], 0
      %s129 = sshll.u32 [#allocation8], 4
      %s130 = int_to_ptr.vmem [resolvable:$true] %s129
      %s131 = sshll.u32 %s4, 4
      %s132 = int_to_ptr.hbm [resolvable:$true] %s131
      %134 = dma.vmem_to_hbm [thread:$0]  %s130, 16, %s132, [#allocation9]
    $region29: #{tpu_custom_call.1} parent=1 // pred_fallthru
      _
    // Predicated region
    $region30: #{tpu_custom_call.1} parent=1 // pred_check
      _
    $region31: #{tpu_custom_call.1} parent=1 // pred_check_branch
      %136 = sbr.rel (0) target = $region33
    $region32: #{tpu_custom_call.1} parent=1 // pred_region
      %138 = vsyncadd [#allocation9], 0
      %s140 = sshll.u32 [#allocation10], 4
      %s141 = int_to_ptr.vmem [resolvable:$true] %s140
      %s142 = sshll.u32 %s5, 4
      %s143 = int_to_ptr.hbm [resolvable:$true] %s142
      %145 = dma.vmem_to_hbm [thread:$0]  %s141, 16, %s143, [#allocation9]
    $region33: #{tpu_custom_call.1} parent=1 // pred_fallthru
      _
    // Predicated region
    $region34: #{tpu_custom_call.1} parent=1 // pred_check
      _
    $region35: #{tpu_custom_call.1} parent=1 // pred_check_branch
      %147 = sbr.rel (0) target = $region37
    $region36: #{tpu_custom_call.1} parent=1 // pred_region
      %149 = dma.done [#allocation4], 128
    $region37: #{tpu_custom_call.1} parent=1 // pred_fallthru
      _
    // Predicated region
    $region38: #{tpu_custom_call.1} parent=1 // pred_check
      _
    $region39: #{tpu_custom_call.1} parent=1 // pred_check_branch
      %151 = sbr.rel (0) target = $region41
    $region40: #{tpu_custom_call.1} parent=1 // pred_region
      %153 = dma.done [#allocation9], 16
    $region41: #{tpu_custom_call.1} parent=1 // pred_fallthru
      _
    // Predicated region
    $region42: #{tpu_custom_call.1} parent=1 // pred_check
      _
    $region43: #{tpu_custom_call.1} parent=1 // pred_check_branch
      %155 = sbr.rel (0) target = $region45
    $region44: #{tpu_custom_call.1} parent=1 // pred_region
      %157 = dma.done [#allocation9], 16
    $region45: #{tpu_custom_call.1} parent=1 // pred_fallthru
      _
    %158 = vsyncpa [#allocation3], 1
    %159 = vsyncpa [#allocation6], 1
    %160 = vsyncpa [#allocation4], 1
    %161 = vsyncpa [#allocation9], 1

</llo_original>
